<compile_context>
chip_gen: v7x
topology: tpu7x:2x2x1
jax: 0.10.0
libtpu: 0.0.40
codegen_flags: <defaults>
</compile_context>

<pallas_src>
import jax
import jax.numpy as jnp
from jax.experimental import pallas as pl
from jax.experimental.pallas import tpu as pltpu

_LANES = 128
_SUBLANES = 8
_MAX_TILE_ROWS = 8192                      # 8192 x 128 f32 = 4 MiB per buffer
_DEFAULT_VMEM_BYTES = 64 * 1024 * 1024     # conservative (v7x physical VMEM)


def _tpu_vmem_capacity_bytes():
    try:
        info = pltpu.get_tpu_info()
        v = getattr(info, "vmem_capacity_bytes", None)
        if isinstance(v, int) and v > 0:
            return v
    except Exception:
        pass
    return _DEFAULT_VMEM_BYTES


def _num_tensorcores():
    """Best-effort TensorCore count; 1 (always safe) if undeterminable."""
    try:
        info = pltpu.get_tpu_info()
        for attr in ("num_tensorcores", "tensorcore_count", "num_cores",
                     "cores_per_chip", "tensor_cores_per_chip"):
            v = getattr(info, attr, None)
            if isinstance(v, int) and v > 0:
                return v
    except Exception:
        pass
    return 1


_VMEM_CAPACITY = _tpu_vmem_capacity_bytes()
# Explicit scoped-VMEM request: 3/4 of physical, never above 64 MiB.
# v5e/v6e (128 MiB physical) -> 64 MiB; v7x (64 MiB physical) -> 48 MiB.
_VMEM_LIMIT = int(min((_VMEM_CAPACITY * 3) // 4, 64 * 1024 * 1024))
_NUM_TC = _num_tensorcores()


def _make_wmse_kernel(rows_per_core, tile_rows, has_weights):
    """rows_per_core / tile_rows are static ints; tile_rows % 8 == 0."""
    needs_mask = (rows_per_core % tile_rows) != 0
    blocks = tile_rows // _SUBLANES

    def _partial_sum(x):
        # (tile_rows, 128) -> (8, 128): sublane-preserving reshape, vreg adds.
        return x.reshape(blocks, _SUBLANES, _LANES).sum(axis=0)

    def kernel(*refs):
        if has_weights:
            yp_ref, yt_ref, w_ref, out_ref, acc_ref = refs
        else:
            yp_ref, yt_ref, out_ref, acc_ref = refs
            w_ref = None

        s = pl.program_id(1)                 # reduction axis (last in grid)
        last = pl.num_programs(1) - 1

        @pl.when(s == 0)
        def _():
            acc_ref[...] = jnp.zeros_like(acc_ref)

        # Native-dtype loads, f32 math.
        d = yp_ref[...].astype(jnp.float32) - yt_ref[...].astype(jnp.float32)
        wse = d * d
        if has_weights:
            wse = wse * w_ref[...].astype(jnp.float32)

        if needs_mask:
            # Only the ragged last block can contain garbage rows past
            # rows_per_core; mask there only, keep steady state unmasked.
            @pl.when(s != last)
            def _():
                acc_ref[...] += _partial_sum(wse)

            @pl.when(s == last)
            def _():
                row_ids = s * tile_rows + jax.lax.broadcasted_iota(
                    jnp.int32, wse.shape, 0)
                acc_ref[...] += _partial_sum(
                    jnp.where(row_ids < rows_per_core, wse, 0.0))
        else:
            acc_ref[...] += _partial_sum(wse)

        @pl.when(s == last)
        def _():
            out_ref[...] = acc_ref[...]

    return kernel


@jax.jit
def weighted_mse_loss(y_pred, y_true, weights):
    """Pallas implementation of WeightedMSELoss.forward."""
    assert y_pred.shape == y_true.shape
    n = y_pred.size  # static element count

    # Scalar weight: never stream it from HBM -- mean(sq * w) == w * mean(sq).
    scalar_weight = (weights.size == 1)
    has_weights = not scalar_weight
    if has_weights and weights.shape != y_pred.shape:
        # TODO(synk): per-channel / partially-broadcast weights could be fed
        # via a BlockSpec pinning the broadcast dims to 0 instead of
        # materializing the broadcast in HBM.
        weights = jnp.broadcast_to(weights, y_pred.shape)

    # Flatten (zero-copy reshapes of contiguous arrays) and pad to a whole
    # number of (8, 128) tiles; padded diffs are 0 so the sum is unbiased.
    yp = y_pred.reshape(-1)
    yt = y_true.reshape(-1)
    pad = (-n) % (_LANES * _SUBLANES)
    if pad:
        yp = jnp.pad(yp, (0, pad))
        yt = jnp.pad(yt, (0, pad))
    rows = (n + pad) // _LANES  # multiple of 8

    inputs = [yp, yt]
    if has_weights:
        w = weights.reshape(-1)
        if pad:
            w = jnp.pad(w, (0, pad))
        inputs.append(w)

    # Leading "parallel" axis only when the chip actually has >1 TensorCore
    # (v7x megacore); on single-TC v5e/v6e it stays a single-iteration axis.
    num_cores = _NUM_TC if (_NUM_TC > 1 and rows % (_NUM_TC * _SUBLANES) == 0) else 1
    rows_per_core = rows // num_cores

    # Tile sizing from the explicit VMEM budget: with the (8, 128) accumulator
    # the double-buffered native-dtype input streams are the whole cost.
    itemsize = max(x.dtype.itemsize for x in inputs)
    bytes_per_row = len(inputs) * 2 * _LANES * itemsize
    usable = (_VMEM_LIMIT * 3) // 4  # headroom for output / runtime internals
    tile_rows = min(rows_per_core, _MAX_TILE_ROWS, usable // bytes_per_row)
    tile_rows = max(_SUBLANES, (tile_rows // _SUBLANES) * _SUBLANES)
    steps = pl.cdiv(rows_per_core, tile_rows)

    shape3 = (num_cores, rows_per_core, _LANES)
    slabs = [x.reshape(shape3) for x in inputs]

    in_spec = pl.BlockSpec((None, tile_rows, _LANES), lambda c, s: (c, s, 0))
    out_spec = pl.BlockSpec((_SUBLANES, _LANES), lambda c, s: (c, 0))

    out_bytes = num_cores * _SUBLANES * _LANES * 4
    cost = pl.CostEstimate(
        flops=3 * n,
        transcendentals=0,
        bytes_accessed=sum(x.size * x.dtype.itemsize for x in slabs) + out_bytes,
    )

    partials = pl.pallas_call(
        _make_wmse_kernel(rows_per_core, tile_rows, has_weights),
        out_shape=jax.ShapeDtypeStruct(
            (num_cores * _SUBLANES, _LANES), jnp.float32),
        grid_spec=pltpu.PrefetchScalarGridSpec(
            num_scalar_prefetch=0,
            grid=(num_cores, steps),
            in_specs=[in_spec] * len(slabs),
            out_specs=out_spec,
            scratch_shapes=[pltpu.VMEM((_SUBLANES, _LANES), jnp.float32)],
        ),
        compiler_params=pltpu.CompilerParams(
            dimension_semantics=("parallel", "arbitrary"),
            vmem_limit_bytes=_VMEM_LIMIT,
        ),
        cost_estimate=cost,
    )(*slabs)

    total = jnp.sum(partials)  # tiny (num_cores*8, 128) reduce in plain XLA
    if scalar_weight:
        total = total * weights.reshape(())
    return total * (1.0 / n)   # n is static -> compile-time reciprocal


if __name__ == "__main__":
    key = jax.random.PRNGKey(0)
    k1, k2, k3 = jax.random.split(key, 3)

    B, C, H, W = 2, 4, 16, 16  # NCHW, as in the PyTorch module
    y_pred = jax.random.normal(k1, (B, C, H, W), dtype=jnp.float32)
    y_true = jax.random.normal(k2, (B, C, H, W), dtype=jnp.float32)
    # Deterministic "weights" parameter (same shape as the inputs).
    weights = jax.random.uniform(k3, (B, C, H, W), dtype=jnp.float32) + 0.5

    loss = weighted_mse_loss(y_pred, y_true, weights)
    jax.block_until_ready(loss)

    # Reference check in plain JAX (same math as the PyTorch forward).
    ref = jnp.mean(jnp.square(y_pred - y_true) * weights)
    assert jnp.allclose(loss, ref, rtol=1e-5, atol=1e-6), (loss, ref)

    # Also exercise the scalar-weight fast path (weights not streamed).
    w_scalar = jnp.asarray(0.75, dtype=jnp.float32)
    loss_s = weighted_mse_loss(y_pred, y_true, w_scalar)
    jax.block_until_ready(loss_s)
    ref_s = jnp.mean(jnp.square(y_pred - y_true) * w_scalar)
    assert jnp.allclose(loss_s, ref_s, rtol=1e-5, atol=1e-6), (loss_s, ref_s)

    print("KERNEL_OK")
</pallas_src>

<mosaic_0001>
module attributes {stable_mosaic.version = 11 : i64} {
  func.func @kernel(%arg0: i32, %arg1: i32, %arg2: memref<1x16x128xf32, #tpu.memory_space<vmem>>, %arg3: memref<1x16x128xf32, #tpu.memory_space<vmem>>, %arg4: memref<1x16x128xf32, #tpu.memory_space<vmem>>, %arg5: memref<8x128xf32, #tpu.memory_space<vmem>>, %arg6: memref<8x128xf32, #tpu.memory_space<vmem>>) attributes {dimension_semantics = [#tpu.dimension_semantics<parallel>, #tpu.dimension_semantics<arbitrary>], iteration_bounds = array<i64: 1, 1>, scalar_prefetch = 0 : i64, scratch_operands = 1 : i64, tpu.core_type = #tpu.core_type<tc>, window_params = [{transform_indices = @transform_0, window_bounds = array<i64: 1, 16, 128>}, {transform_indices = @transform_1, window_bounds = array<i64: 1, 16, 128>}, {transform_indices = @transform_2, window_bounds = array<i64: 1, 16, 128>}, {transform_indices = @transform_3, window_bounds = array<i64: 8, 128>}]} {
    %c0_i32 = arith.constant 0 : i32
    %0 = arith.cmpi eq, %arg1, %c0_i32 : i32
    %1 = arith.extui %0 : i1 to i32
    %c0_i32_0 = arith.constant 0 : i32
    %2 = arith.cmpi ne, %1, %c0_i32_0 : i32
    scf.if %2 {
      %cst_15 = arith.constant 0.000000e+00 : f32
      %20 = vector.broadcast %cst_15 : f32 to vector<8x128xf32>
      %c0_16 = arith.constant 0 : index
      %c0_17 = arith.constant 0 : index
      %21 = vector.load %arg6[%c0_16, %c0_17] : memref<8x128xf32, #tpu.memory_space<vmem>>, vector<8x128xf32>
      tpu.vector_store %arg6[%c0_16, %c0_17], %20 {strides = array<i32>} : memref<8x128xf32, #tpu.memory_space<vmem>>, vector<8x128xf32>,
    } else {
    }
    %c0 = arith.constant 0 : index
    %c0_1 = arith.constant 0 : index
    %c0_2 = arith.constant 0 : index
    %3 = vector.load %arg2[%c0, %c0_1, %c0_2] : memref<1x16x128xf32, #tpu.memory_space<vmem>>, vector<1x16x128xf32>
    %4 = vector.shape_cast %3 : vector<1x16x128xf32> to vector<16x128xf32>
    %c0_3 = arith.constant 0 : index
    %c0_4 = arith.constant 0 : index
    %c0_5 = arith.constant 0 : index
    %5 = vector.load %arg3[%c0_3, %c0_4, %c0_5] : memref<1x16x128xf32, #tpu.memory_space<vmem>>, vector<1x16x128xf32>
    %6 = vector.shape_cast %5 : vector<1x16x128xf32> to vector<16x128xf32>
    %7 = arith.subf %4, %6 : vector<16x128xf32>
    %8 = arith.mulf %7, %7 : vector<16x128xf32>
    %c0_6 = arith.constant 0 : index
    %c0_7 = arith.constant 0 : index
    %c0_8 = arith.constant 0 : index
    %9 = vector.load %arg4[%c0_6, %c0_7, %c0_8] : memref<1x16x128xf32, #tpu.memory_space<vmem>>, vector<1x16x128xf32>
    %10 = vector.shape_cast %9 : vector<1x16x128xf32> to vector<16x128xf32>
    %11 = arith.mulf %8, %10 : vector<16x128xf32>
    %c0_9 = arith.constant 0 : index
    %c0_10 = arith.constant 0 : index
    %12 = vector.load %arg6[%c0_9, %c0_10] : memref<8x128xf32, #tpu.memory_space<vmem>>, vector<8x128xf32>
    %13 = vector.shape_cast %11 : vector<16x128xf32> to vector<2x8x128xf32>
    %cst = arith.constant dense<0.000000e+00> : vector<8x128xf32>
    %14 = vector.multi_reduction <add>, %13, %cst [0] : vector<2x8x128xf32> to vector<8x128xf32>
    %15 = arith.addf %12, %14 : vector<8x128xf32>
    %c0_11 = arith.constant 0 : index
    %c0_12 = arith.constant 0 : index
    %16 = vector.load %arg6[%c0_11, %c0_12] : memref<8x128xf32, #tpu.memory_space<vmem>>, vector<8x128xf32>
    tpu.vector_store %arg6[%c0_11, %c0_12], %15 {strides = array<i32>} : memref<8x128xf32, #tpu.memory_space<vmem>>, vector<8x128xf32>,
    %c0_i32_13 = arith.constant 0 : i32
    %17 = arith.cmpi eq, %arg1, %c0_i32_13 : i32
    %18 = arith.extui %17 : i1 to i32
    %c0_i32_14 = arith.constant 0 : i32
    %19 = arith.cmpi ne, %18, %c0_i32_14 : i32
    scf.if %19 {
      %c0_15 = arith.constant 0 : index
      %c0_16 = arith.constant 0 : index
      %20 = vector.load %arg6[%c0_15, %c0_16] : memref<8x128xf32, #tpu.memory_space<vmem>>, vector<8x128xf32>
      %c0_17 = arith.constant 0 : index
      %c0_18 = arith.constant 0 : index
      %21 = vector.load %arg5[%c0_17, %c0_18] : memref<8x128xf32, #tpu.memory_space<vmem>>, vector<8x128xf32>
      tpu.vector_store %arg5[%c0_17, %c0_18], %20 {strides = array<i32>} : memref<8x128xf32, #tpu.memory_space<vmem>>, vector<8x128xf32>,
    } else {
    }
    return
  }
  func.func @transform_0(%arg0: i32, %arg1: i32) -> (i32, i32, i32) {
    %c0_i32 = arith.constant 0 : i32
    %c0_i32_0 = arith.constant 0 : i32
    return %arg0, %arg1, %c0_i32 : i32, i32, i32
  }
  func.func @transform_1(%arg0: i32, %arg1: i32) -> (i32, i32, i32) {
    %c0_i32 = arith.constant 0 : i32
    %c0_i32_0 = arith.constant 0 : i32
    return %arg0, %arg1, %c0_i32 : i32, i32, i32
  }
  func.func @transform_2(%arg0: i32, %arg1: i32) -> (i32, i32, i32) {
    %c0_i32 = arith.constant 0 : i32
    %c0_i32_0 = arith.constant 0 : i32
    return %arg0, %arg1, %c0_i32 : i32, i32, i32
  }
  func.func @transform_3(%arg0: i32, %arg1: i32) -> (i32, i32) {
    %c0_i32 = arith.constant 0 : i32
    %c0_i32_0 = arith.constant 0 : i32
    return %arg0, %c0_i32 : i32, i32
  }
}

</mosaic_0001>

<llo_original>
// kernel: weighted_mse_loss.1
$region0: #{weighted_mse_loss.1}
  #allocation0 [shape = 'u32[]', space=smem, size = 0x4, offset = 0x4, fixed_abs, tag = 'smem constant byte address 0x4 - core index']
  #allocation1 [shape = 'u32[144,128]{1,0:T(1,128)}', space=vmem, size = 0x12000, scoped, tag = 'internal scratch']
  #allocation2 [shape = 'f32[8,128]{1,0:T(8,128)}', space=vmem, size = 0x1000, scoped, tag = 'scratch operand']
  %s0 = inlined_call_operand.vmem [shape: f32[1,16,128], index: 0, kind: input, shape index: {}]
  %s1 = inlined_call_operand.vmem [shape: f32[1,16,128], index: 1, kind: input, shape index: {}]
  %s2 = inlined_call_operand.vmem [shape: f32[1,16,128], index: 2, kind: input, shape index: {}]
  %s3 = inlined_call_operand.vmem [shape: f32[8,128], index: 3, kind: output, shape index: {}]
  %s4 = sld [smem:[#allocation0]]
  $region30: #{weighted_mse_loss.1} parent=0
    _
  %s6 = ssub.s32 1, %s4
  %s7 = scalar_select 0, %s6, %s4
  // Predicated region
  $region2: #{weighted_mse_loss.1} parent=0 // pred_check
    _
  $region3: #{weighted_mse_loss.1} parent=0 // pred_check_branch
    %9 = sbr.rel (0) target = $region5
  $region4: #{weighted_mse_loss.1} parent=0 // pred_region
    _
  $region5: #{weighted_mse_loss.1} parent=0 // pred_fallthru
    _
  // Predicated region
  $region6: #{weighted_mse_loss.1} parent=0 // pred_check
    _
  $region7: #{weighted_mse_loss.1} parent=0 // pred_check_branch
    %11 = sbr.rel (0) target = $region9
  $region8: #{weighted_mse_loss.1} parent=0 // pred_region
    _
  $region9: #{weighted_mse_loss.1} parent=0 // pred_fallthru
    _
  // Predicated region
  $region10: #{weighted_mse_loss.1} parent=0 // pred_check
    _
  $region11: #{weighted_mse_loss.1} parent=0 // pred_check_branch
    %13 = sbr.rel (0) target = $region13
  $region12: #{weighted_mse_loss.1} parent=0 // pred_region
    _
  $region13: #{weighted_mse_loss.1} parent=0 // pred_fallthru
    _
  %p14 = scmp.eq.s32.totalorder 0, 0
  // Predicated region
  $region14: #{weighted_mse_loss.1} parent=0 // pred_check
    %p15 = pneg %p14
  $region15: #{weighted_mse_loss.1} parent=0 // pred_check_branch
    %17 = sbr.rel (%p15) target = $region17
  $region16: #{weighted_mse_loss.1} parent=0 // pred_region
    %18 = vst [vmem:[#allocation2] sm:$0xff] 0.0
  $region17: #{weighted_mse_loss.1} parent=0 // pred_fallthru
    _
  %v19 = vld [vmem:[%s0] sm:$0xff]
  %v20 = vld [vmem:[%s0 + $0x8] sm:$0xff]
  %v21 = vld [vmem:[%s1] sm:$0xff]
  %v22 = vld [vmem:[%s1 + $0x8] sm:$0xff]
  %v23 = vsub.f32 %v19, %v21
  %v24 = vsub.f32 %v20, %v22
  %v25 = vmul.f32 %v23, %v23
  %v26 = vmul.f32 %v24, %v24
  %v27 = vld [vmem:[%s2] sm:$0xff]
  %v28 = vld [vmem:[%s2 + $0x8] sm:$0xff]
  %v29 = vmul.f32 %v25, %v27
  %v30 = vmul.f32 %v26, %v28
  %v31 = vld [vmem:[#allocation2] sm:$0xff]
  %v32 = vadd.f32 %v29, %v30
  %v33 = vadd.f32 %v31, %v32
  %34 = vst [vmem:[#allocation2] sm:$0xff] %v33
  // Predicated region
  $region18: #{weighted_mse_loss.1} parent=0 // pred_check
    %p35 = pneg %p14
  $region19: #{weighted_mse_loss.1} parent=0 // pred_check_branch
    %37 = sbr.rel (%p35) target = $region21
  $region20: #{weighted_mse_loss.1} parent=0 // pred_region
    %v38 = vld [vmem:[#allocation2] sm:$0xff]
    %39 = vst [vmem:[%s3] sm:$0xff] %v38
  $region21: #{weighted_mse_loss.1} parent=0 // pred_fallthru
    _
  // Predicated region
  $region22: #{weighted_mse_loss.1} parent=0 // pred_check
    _
  $region23: #{weighted_mse_loss.1} parent=0 // pred_check_branch
    %41 = sbr.rel (0) target = $region25
  $region24: #{weighted_mse_loss.1} parent=0 // pred_region
    _
  $region25: #{weighted_mse_loss.1} parent=0 // pred_fallthru
    _
  // Predicated region
  $region26: #{weighted_mse_loss.1} parent=0 // pred_check
    _
  $region27: #{weighted_mse_loss.1} parent=0 // pred_check_branch
    %43 = sbr.rel (0) target = $region29
  $region28: #{weighted_mse_loss.1} parent=0 // pred_region
    _
  $region29: #{weighted_mse_loss.1} parent=0 // pred_fallthru
    _

</llo_original>
